<compile_context>
chip_gen: v5e
topology: v5e:2x2
jax: 0.10.0
libtpu: 0.0.40
codegen_flags: <defaults>
</compile_context>

<pallas_src>
import math
import functools

import jax
import jax.numpy as jnp
from jax.experimental import pallas as pl
from jax.experimental.pallas import tpu as pltpu


def _round_up(x: int, m: int) -> int:
    return ((x + m - 1) // m) * m


def nonlinear_kernel(x_ref, w1_ref, b1_ref, w2_ref, b2_ref, o_ref):
    # h = relu(x @ W1 + b1), accumulated in f32 on the MXU.
    h = jnp.dot(x_ref[...], w1_ref[...], preferred_element_type=jnp.float32)
    h = jnp.maximum(h + b1_ref[...], 0.0)              # (TILE_N, H) + (1, H)
    # Cast back to the weight dtype so a bf16 weight path hits the bf16 MXU.
    h = h.astype(w2_ref.dtype)
    # out = h @ W2 + b2 (f32 accumulation, bias add in f32)
    out = jnp.dot(h, w2_ref[...], preferred_element_type=jnp.float32)
    o_ref[...] = (out + b2_ref[...]).astype(o_ref.dtype)


def nonlinear_forward(x, w1, b1, w2, b2, *, tile_n: int = 1024, io_dtype=None):
    """x: (N, D_in), w1: (D_in, H), b1: (1, H), w2: (H, D_out), b2: (1, D_out).

    io_dtype: optional narrower dtype (e.g. jnp.bfloat16) for x / w1 / w2 at the
    kernel boundary (v6e/v7x).  Accumulation stays f32 and the output keeps x's
    original dtype.  Since the kernel is memory-bound this roughly halves the
    dominant HBM read.
    """
    out_dtype = x.dtype
    if io_dtype is not None:
        x = x.astype(io_dtype)
        w1 = w1.astype(io_dtype)
        w2 = w2.astype(io_dtype)
    b1 = b1.astype(jnp.float32)
    b2 = b2.astype(jnp.float32)

    n, d_in = x.shape
    h_dim = w1.shape[1]
    d_out = w2.shape[1]
    x_isz = jnp.dtype(x.dtype).itemsize
    w_isz = jnp.dtype(w1.dtype).itemsize
    o_isz = jnp.dtype(out_dtype).itemsize

    # --- output feature padding only when nearly free -------------------------
    # A block last-dim equal to the full array dim is legal, so by default we
    # store the true (tile_n, D_out) output.  Lane-dense (multiple-of-128)
    # padding only pays when the extra writeback bytes are small (<= 25%).
    pad_cols = (-d_out) % 128
    if pad_cols and pad_cols <= d_out // 4:
        w2 = jnp.pad(w2, ((0, 0), (0, pad_cols)))
        b2 = jnp.pad(b2, ((0, 0), (0, pad_cols)))
        d_out_p = d_out + pad_cols
    else:
        d_out_p = d_out

    # --- batch tiling ----------------------------------------------------------
    # Sublane alignment: 8 rows/vreg for f32, 16 for bf16, 32 for int8/fp8.
    align = max(8, 32 // x_isz)
    tile_n = max(align, _round_up(min(tile_n, n), align))
    steps = -(-n // tile_n)
    # Spread padding evenly across grid steps -> balanced work per step
    # (matters for v7x megacore sharding of the "parallel" axis).
    tile_n = _round_up(-(-n // steps), align)
    n_pad = steps * tile_n
    if n_pad != n:
        x = jnp.pad(x, ((0, n_pad - n), (0, 0)))   # padded rows sliced off below
    grid = (steps,)

    # --- buffering & VMEM budget -----------------------------------------------
    weight_bytes = (d_in * h_dim + h_dim * d_out_p) * w_isz + (h_dim + d_out_p) * 4
    # Pallas double-buffers every input by default; constant-index weights only
    # need one buffer.  Only request it once the weights are big enough to matter.
    single_buf_weights = weight_bytes >= (2 << 20)
    w_mode = pl.Buffered(1) if single_buf_weights else None
    vmem_bytes = (
        (1 if single_buf_weights else 2) * weight_bytes
        + 2 * tile_n * d_in * x_isz            # double-buffered x tiles
        + 2 * tile_n * d_out_p * o_isz         # double-buffered out tiles
        + tile_n * (h_dim + d_out_p) * 4       # f32 intermediates
    )
    # Headroom for compiler-internal scratch; cap well below v7x's 64 MiB VMEM.
    vmem_limit = int(min(48 * 1024 * 1024, max(8 << 20, vmem_bytes + (4 << 20))))

    cost = pl.CostEstimate(
        flops=2 * n * (d_in * h_dim + h_dim * d_out),
        transcendentals=0,
        bytes_accessed=n * d_in * x_isz + weight_bytes + n * d_out * o_isz,
    )

    grid_spec = pl.GridSpec(
        grid=grid,
        in_specs=[
            pl.BlockSpec((tile_n, d_in), lambda i: (i, 0)),           # x tile: pipelined
            pl.BlockSpec((d_in, h_dim), lambda i: (0, 0), pipeline_mode=w_mode),
            pl.BlockSpec((1, h_dim), lambda i: (0, 0), pipeline_mode=w_mode),
            pl.BlockSpec((h_dim, d_out_p), lambda i: (0, 0), pipeline_mode=w_mode),
            pl.BlockSpec((1, d_out_p), lambda i: (0, 0), pipeline_mode=w_mode),
        ],
        out_specs=pl.BlockSpec((tile_n, d_out_p), lambda i: (i, 0)),
    )

    out = pl.pallas_call(
        nonlinear_kernel,
        out_shape=jax.ShapeDtypeStruct((n_pad, d_out_p), out_dtype),
        grid_spec=grid_spec,
        compiler_params=pltpu.CompilerParams(
            dimension_semantics=("parallel",),   # rows independent -> megacore-shardable
            vmem_limit_bytes=vmem_limit,
        ),
        cost_estimate=cost,
    )(x, w1, b1, w2, b2)

    if n_pad != n or d_out_p != d_out:
        out = out[:n, :d_out]
    return out


def xavier_uniform(key, fan_in, fan_out, gain):
    # matches torch.nn.init.xavier_uniform_ with gain=calculate_gain('relu')=sqrt(2)
    bound = gain * math.sqrt(6.0 / (fan_in + fan_out))
    # stored as (fan_in, fan_out) == transpose of the PyTorch (out, in) weight
    return jax.random.uniform(
        key, (fan_in, fan_out), minval=-bound, maxval=bound, dtype=jnp.float32
    )


def _reference(x, w1, b1, w2, b2):
    return jnp.maximum(x @ w1 + b1, 0.0) @ w2 + b2


if __name__ == "__main__":
    # Shapes implied by the module: input_dim=16, hidden_dim=32, output_dim=8.
    input_dim, hidden_dim, output_dim = 16, 32, 8
    gain = math.sqrt(2.0)  # nn.init.calculate_gain('relu')

    key = jax.random.PRNGKey(0)
    kx1, kx2, kw1, kw2 = jax.random.split(key, 4)

    w1 = xavier_uniform(kw1, input_dim, hidden_dim, gain)
    b1 = jnp.zeros((1, hidden_dim), dtype=jnp.float32)   # init.constant_(bias, 0.0)
    w2 = xavier_uniform(kw2, hidden_dim, output_dim, gain)
    b2 = jnp.zeros((1, output_dim), dtype=jnp.float32)

    # Case 1: the original small batch (single grid step, no padding anywhere).
    fwd = jax.jit(functools.partial(nonlinear_forward))
    x_small = jax.random.normal(kx1, (8, input_dim), dtype=jnp.float32)
    out_small = fwd(x_small, w1, b1, w2, b2)
    jax.block_until_ready(out_small)
    ref_small = _reference(x_small, w1, b1, w2, b2)
    assert out_small.shape == (8, output_dim)
    assert jnp.allclose(out_small, ref_small, atol=1e-5, rtol=1e-5)

    # Case 2: non-multiple batch -> 3 *balanced* grid steps (tile_n 128 -> 104),
    # exercising N-tiling, row padding, and the parallel grid axis.
    fwd_tiled = jax.jit(functools.partial(nonlinear_forward, tile_n=128))
    x_big = jax.random.normal(kx2, (300, input_dim), dtype=jnp.float32)
    out_big = fwd_tiled(x_big, w1, b1, w2, b2)
    jax.block_until_ready(out_big)
    ref_big = _reference(x_big, w1, b1, w2, b2)
    assert out_big.shape == (300, output_dim)
    assert jnp.allclose(out_big, ref_big, atol=1e-5, rtol=1e-5)

    # Case 3: bf16 I/O path (v6e/v7x) with f32 accumulation; loose tolerance
    # because x/W are bf16-rounded at the wrapper boundary.
    fwd_bf16 = jax.jit(functools.partial(nonlinear_forward, io_dtype=jnp.bfloat16))
    out_bf16 = fwd_bf16(x_big, w1, b1, w2, b2)
    jax.block_until_ready(out_bf16)
    assert out_bf16.shape == (300, output_dim)
    assert out_bf16.dtype == jnp.float32
    assert jnp.allclose(out_bf16, ref_big, atol=1e-1, rtol=1e-1)

    # TODO(synk): at these toy feature sizes (16/32/8) each f32 vreg carries only
    # 16-32 useful lanes; a lane-dense repack (block-diagonal W1 over 8 rows) is
    # the only fix, and should be measured before committing.
    print("KERNEL_OK")
</pallas_src>

<mosaic_0001>
module attributes {stable_mosaic.version = 11 : i64} {
  func.func @nonlinear_kernel(%arg0: i32, %arg1: memref<8x16xf32, #tpu.memory_space<vmem>>, %arg2: memref<16x32xf32, #tpu.memory_space<vmem>>, %arg3: memref<1x32xf32, #tpu.memory_space<vmem>>, %arg4: memref<32x8xf32, #tpu.memory_space<vmem>>, %arg5: memref<1x8xf32, #tpu.memory_space<vmem>>, %arg6: memref<8x8xf32, #tpu.memory_space<vmem>>) attributes {dimension_semantics = [#tpu.dimension_semantics<parallel>], iteration_bounds = array<i64: 1>, scalar_prefetch = 0 : i64, scratch_operands = 0 : i64, tpu.core_type = #tpu.core_type<tc>, window_params = [{transform_indices = @transform_0, window_bounds = array<i64: 8, 16>}, {pipeline_mode = #tpu.pipeline_mode<synchronous>, transform_indices = @transform_1, window_bounds = array<i64: 16, 32>}, {pipeline_mode = #tpu.pipeline_mode<synchronous>, transform_indices = @transform_2, window_bounds = array<i64: 1, 32>}, {pipeline_mode = #tpu.pipeline_mode<synchronous>, transform_indices = @transform_3, window_bounds = array<i64: 32, 8>}, {pipeline_mode = #tpu.pipeline_mode<synchronous>, transform_indices = @transform_4, window_bounds = array<i64: 1, 8>}, {transform_indices = @transform_5, window_bounds = array<i64: 8, 8>}]} {
    %c0 = arith.constant 0 : index
    %c0_0 = arith.constant 0 : index
    %0 = vector.load %arg1[%c0, %c0_0] : memref<8x16xf32, #tpu.memory_space<vmem>>, vector<8x16xf32>
    %c0_1 = arith.constant 0 : index
    %c0_2 = arith.constant 0 : index
    %1 = vector.load %arg2[%c0_1, %c0_2] : memref<16x32xf32, #tpu.memory_space<vmem>>, vector<16x32xf32>
    %cst = arith.constant dense<0.000000e+00> : vector<8x32xf32>
    %2 = tpu.matmul %0, %1, %cst {dimension_numbers = #tpu.dot_dimension_numbers<[1], [0], [0], [1], [0, 0, 1, 1], [], []>} : vector<8x16xf32>, vector<16x32xf32>, vector<8x32xf32> -> vector<8x32xf32>
    %c0_3 = arith.constant 0 : index
    %c0_4 = arith.constant 0 : index
    %3 = vector.load %arg3[%c0_3, %c0_4] : memref<1x32xf32, #tpu.memory_space<vmem>>, vector<1x32xf32>
    %4 = vector.broadcast %3 : vector<1x32xf32> to vector<8x32xf32>
    %5 = arith.addf %2, %4 : vector<8x32xf32>
    %cst_5 = arith.constant 0.000000e+00 : f32
    %6 = vector.broadcast %cst_5 : f32 to vector<8x32xf32>
    %7 = arith.maximumf %5, %6 : vector<8x32xf32>
    %c0_6 = arith.constant 0 : index
    %c0_7 = arith.constant 0 : index
    %8 = vector.load %arg4[%c0_6, %c0_7] : memref<32x8xf32, #tpu.memory_space<vmem>>, vector<32x8xf32>
    %cst_8 = arith.constant dense<0.000000e+00> : vector<8x8xf32>
    %9 = tpu.matmul %7, %8, %cst_8 {dimension_numbers = #tpu.dot_dimension_numbers<[1], [0], [0], [1], [0, 0, 1, 1], [], []>} : vector<8x32xf32>, vector<32x8xf32>, vector<8x8xf32> -> vector<8x8xf32>
    %c0_9 = arith.constant 0 : index
    %c0_10 = arith.constant 0 : index
    %10 = vector.load %arg5[%c0_9, %c0_10] : memref<1x8xf32, #tpu.memory_space<vmem>>, vector<1x8xf32>
    %11 = vector.broadcast %10 : vector<1x8xf32> to vector<8x8xf32>
    %12 = arith.addf %9, %11 : vector<8x8xf32>
    %c0_11 = arith.constant 0 : index
    %c0_12 = arith.constant 0 : index
    %13 = vector.load %arg6[%c0_11, %c0_12] : memref<8x8xf32, #tpu.memory_space<vmem>>, vector<8x8xf32>
    tpu.vector_store %arg6[%c0_11, %c0_12], %12 {strides = array<i32>} : memref<8x8xf32, #tpu.memory_space<vmem>>, vector<8x8xf32>,
    return
  }
  func.func @transform_0(%arg0: i32) -> (i32, i32) {
    %c0_i32 = arith.constant 0 : i32
    %c0_i32_0 = arith.constant 0 : i32
    return %arg0, %c0_i32 : i32, i32
  }
  func.func @transform_1(%arg0: i32) -> (i32, i32) {
    %c0_i32 = arith.constant 0 : i32
    %c0_i32_0 = arith.constant 0 : i32
    %c0_i32_1 = arith.constant 0 : i32
    return %c0_i32, %c0_i32_0 : i32, i32
  }
  func.func @transform_2(%arg0: i32) -> (i32, i32) {
    %c0_i32 = arith.constant 0 : i32
    %c0_i32_0 = arith.constant 0 : i32
    %c0_i32_1 = arith.constant 0 : i32
    return %c0_i32, %c0_i32_0 : i32, i32
  }
  func.func @transform_3(%arg0: i32) -> (i32, i32) {
    %c0_i32 = arith.constant 0 : i32
    %c0_i32_0 = arith.constant 0 : i32
    %c0_i32_1 = arith.constant 0 : i32
    return %c0_i32, %c0_i32_0 : i32, i32
  }
  func.func @transform_4(%arg0: i32) -> (i32, i32) {
    %c0_i32 = arith.constant 0 : i32
    %c0_i32_0 = arith.constant 0 : i32
    %c0_i32_1 = arith.constant 0 : i32
    return %c0_i32, %c0_i32_0 : i32, i32
  }
  func.func @transform_5(%arg0: i32) -> (i32, i32) {
    %c0_i32 = arith.constant 0 : i32
    %c0_i32_0 = arith.constant 0 : i32
    return %arg0, %c0_i32 : i32, i32
  }
}

</mosaic_0001>

<llo_original>
// kernel: nonlinear_forward.1
$region0: #{nonlinear_forward.1}
  #allocation0 [shape = 'u32[]', space=smem, size = 0x4, offset = 0x4, fixed_abs, tag = 'smem constant byte address 0x4 - core index']
  #allocation1 [shape = 'u32[72,128]{1,0:T(1,128)}', space=vmem, size = 0x9000, scoped, tag = 'internal scratch']
  %s0 = inlined_call_operand.vmem [shape: f32[8,16], index: 0, kind: input, shape index: {}]
  %s1 = inlined_call_operand.vmem [shape: f32[16,32], index: 1, kind: input, shape index: {}]
  %s2 = inlined_call_operand.vmem [shape: f32[1,32], index: 2, kind: input, shape index: {}]
  %s3 = inlined_call_operand.vmem [shape: f32[32,8], index: 3, kind: input, shape index: {}]
  %s4 = inlined_call_operand.vmem [shape: f32[1,8], index: 4, kind: input, shape index: {}]
  %s5 = inlined_call_operand.hbm [shape: f32[8,8], index: 5, kind: output, shape index: {}]
  %s6 = sld [smem:[#allocation0]]
  $region30: #{nonlinear_forward.1} parent=0
    _
  %s8 = ssub.s32 1, %s6
  %s9 = scalar_select 0, %s8, %s6
  $region1: #{nonlinear_forward.1} parent=0
    #allocation2 [shape = 'u8[4096]{0}', space=vmem, size = 0x1000, scoped, tag = 'output window, operand 0, single buffered']
    #allocation3 [shape = 's32[1]{0}', space=sflag, size = 0x4, scoped, tag = 'scoped memory for nonlinear_forward.1']
    %10 = vsyncpa [#allocation3], 0
    // Predicated region
    $region2: #{nonlinear_forward.1} parent=1 // pred_check
      _
    $region3: #{nonlinear_forward.1} parent=1 // pred_check_branch
      %12 = sbr.rel (0) target = $region5
    $region4: #{nonlinear_forward.1} parent=1 // pred_region
      _
    $region5: #{nonlinear_forward.1} parent=1 // pred_fallthru
      _
    // Predicated region
    $region6: #{nonlinear_forward.1} parent=1 // pred_check
      _
    $region7: #{nonlinear_forward.1} parent=1 // pred_check_branch
      %14 = sbr.rel (0) target = $region9
    $region8: #{nonlinear_forward.1} parent=1 // pred_region
      _
    $region9: #{nonlinear_forward.1} parent=1 // pred_fallthru
      _
    // Predicated region
    $region10: #{nonlinear_forward.1} parent=1 // pred_check
      _
    $region11: #{nonlinear_forward.1} parent=1 // pred_check_branch
      %16 = sbr.rel (0) target = $region13
    $region12: #{nonlinear_forward.1} parent=1 // pred_region
      _
    $region13: #{nonlinear_forward.1} parent=1 // pred_fallthru
      _
    // Predicated region
    $region14: #{nonlinear_forward.1} parent=1 // pred_check
      _
    $region15: #{nonlinear_forward.1} parent=1 // pred_check_branch
      %18 = sbr.rel (0) target = $region17
    $region16: #{nonlinear_forward.1} parent=1 // pred_region
      _
    $region17: #{nonlinear_forward.1} parent=1 // pred_fallthru
      _
    // Predicated region
    $region18: #{nonlinear_forward.1} parent=1 // pred_check
      _
    $region19: #{nonlinear_forward.1} parent=1 // pred_check_branch
      %20 = sbr.rel (0) target = $region21
    $region20: #{nonlinear_forward.1} parent=1 // pred_region
      _
    $region21: #{nonlinear_forward.1} parent=1 // pred_fallthru
      _
    %v21 = vld [vmem:[%s0] sm:$0xff]
    %v22 = vld [vmem:[%s1] sm:$0xff]
    %v23 = vld [vmem:[%s1 + $0x8] sm:$0xff]
    %v24 = vld [vmem:[%s2] sm:$0x1]
    %v26 = vperm.slane %v24, 0
    %vm28 = vcmask 130048
    %v30 = vsel %vm28, %v21, 0
    %32 = vmatpush.msra.mxu0 0.0
    %33 = vmatpush.msra.mxu0 0.0
    %34 = vmatpush.msra.mxu0 0.0
    %35 = vmatpush.msra.mxu0 0.0
    %36 = vmatpush.msra.mxu0 0.0
    %37 = vmatpush.msra.mxu0 0.0
    %38 = vmatpush.msra.mxu0 0.0
    %39 = vmatpush.msra.mxu0 0.0
    %40 = vmatpush.msra.mxu0 0.0
    %41 = vmatpush.msra.mxu0 0.0
    %42 = vmatpush.msra.mxu0 0.0
    %43 = vmatpush.msra.mxu0 0.0
    %44 = vmatpush.msra.mxu0 0.0
    %45 = vmatpush.msra.mxu0 0.0
    %46 = vmatpush.msra.mxu0 %v23
    %47 = vmatpush.msra.mxu0 %v22
    %48 = vmatmul.f32.gmra.mxu0 %v30
    %v49 = vpop.f32.mrf.mxu0
    %v50 = vadd.f32 %v26, %v49
    %51 = vdwg.mxu0
    %v52 = vmax.f32 %v50, 0.0
    %v53 = vld [vmem:[%s3] sm:$0xff]
    %v54 = vld [vmem:[%s3 + $0x8] sm:$0xff]
    %v55 = vld [vmem:[%s3 + $0x10] sm:$0xff]
    %v56 = vld [vmem:[%s3 + $0x18] sm:$0xff]
    %v57 = vld [vmem:[%s4] sm:$0x1]
    %v59 = vperm.slane %v57, 0
    %vm61 = vcmask 261120
    %v63 = vsel %vm61, %v52, 0
    %65 = vmatpush.msra.mxu0 0.0
    %66 = vmatpush.msra.mxu0 0.0
    %67 = vmatpush.msra.mxu0 0.0
    %68 = vmatpush.msra.mxu0 0.0
    %69 = vmatpush.msra.mxu0 0.0
    %70 = vmatpush.msra.mxu0 0.0
    %71 = vmatpush.msra.mxu0 0.0
    %72 = vmatpush.msra.mxu0 0.0
    %73 = vmatpush.msra.mxu0 0.0
    %74 = vmatpush.msra.mxu0 0.0
    %75 = vmatpush.msra.mxu0 0.0
    %76 = vmatpush.msra.mxu0 0.0
    %77 = vmatpush.msra.mxu0 %v56
    %78 = vmatpush.msra.mxu0 %v55
    %79 = vmatpush.msra.mxu0 %v54
    %80 = vmatpush.msra.mxu0 %v53
    %81 = vmatmul.f32.gmra.mxu0 %v63
    %v82 = vpop.f32.mrf.mxu0
    %v83 = vadd.f32 %v59, %v82
    %84 = vdwg.mxu0
    %vm85 = vcmask 64512
    %86 = vst.msk [vmem:[#allocation2] sm:$0xff] %vm85, %v83
    // Predicated region
    $region22: #{nonlinear_forward.1} parent=1 // pred_check
      _
    $region23: #{nonlinear_forward.1} parent=1 // pred_check_branch
      %88 = sbr.rel (0) target = $region25
    $region24: #{nonlinear_forward.1} parent=1 // pred_region
      %90 = vsyncadd [#allocation3], 0
      %s92 = sshll.u32 [#allocation2], 4
      %s93 = int_to_ptr.vmem [resolvable:$true] %s92
      %s94 = sshll.u32 %s5, 4
      %s95 = int_to_ptr.hbm [resolvable:$true] %s94
      %97 = dma.vmem_to_hbm [thread:$0]  %s93, 128, %s95, [#allocation3]
    $region25: #{nonlinear_forward.1} parent=1 // pred_fallthru
      _
    // Predicated region
    $region26: #{nonlinear_forward.1} parent=1 // pred_check
      _
    $region27: #{nonlinear_forward.1} parent=1 // pred_check_branch
      %99 = sbr.rel (0) target = $region29
    $region28: #{nonlinear_forward.1} parent=1 // pred_region
      %101 = dma.done [#allocation3], 128
    $region29: #{nonlinear_forward.1} parent=1 // pred_fallthru
      _
    %102 = vsyncpa [#allocation3], 1

</llo_original>
